<compile_context>
chip_gen: v5e
topology: v5e:2x2
jax: 0.10.0
libtpu: 0.0.40
codegen_flags: <defaults>
</compile_context>

<pallas_src>
import functools

import jax
import jax.numpy as jnp
from jax.experimental import pallas as pl
from jax.experimental.pallas import tpu as pltpu


_NEG_INF = -1e9


def _softmax_and_write(s, v_ref, out_ref, attn_ref):
    """Row-wise softmax of f32 scores s (bb, tq, Lk); writes attn and attn@v."""
    m = jnp.max(s, axis=-1, keepdims=True)
    e = jnp.exp(s - m)
    denom = jnp.sum(e, axis=-1, keepdims=True)
    # EUP approximate reciprocal (separate VLIW slot) + one Newton step for
    # ~f32 accuracy, instead of a VPU divide over the whole (tq, Lk) tile.
    inv = pl.reciprocal(denom, approx=True)
    inv = inv * (2.0 - denom * inv)
    # One low-precision copy of the un-normalized probabilities, reused for
    # both the attn store and the PV matmul (bf16-native MXU for bf16 inputs).
    p = e.astype(attn_ref.dtype)
    attn_ref[...] = p * inv.astype(attn_ref.dtype)
    acc = jnp.einsum("bqk,bkd->bqd", p, v_ref[...],
                     preferred_element_type=jnp.float32)
    # Deferred normalization on the small (tq, Dv) result tile.
    out_ref[...] = (acc * inv).astype(out_ref.dtype)


def _sdpa_kernel(q_ref, k_ref, v_ref, out_ref, attn_ref, *, inv_temp):
    # Scale the small (bb, tq, D) q tile (matches torch's q / temperature)
    # instead of the much larger (bb, tq, Lk) score tile.
    q = q_ref[...] * inv_temp
    s = jnp.einsum("bqd,bkd->bqk", q, k_ref[...],
                   preferred_element_type=jnp.float32)
    _softmax_and_write(s, v_ref, out_ref, attn_ref)


def _sdpa_masked_kernel(q_ref, k_ref, v_ref, mask_ref, out_ref, attn_ref, *,
                        inv_temp):
    q = q_ref[...] * inv_temp
    s = jnp.einsum("bqd,bkd->bqk", q, k_ref[...],
                   preferred_element_type=jnp.float32)
    # masked_fill(mask == 0, -1e9) on the resident f32 score tile.  The mask
    # block may carry size-1 (broadcast) dims; jnp.where broadcasts them.
    s = jnp.where(mask_ref[...] == 0, jnp.float32(_NEG_INF), s)
    _softmax_and_write(s, v_ref, out_ref, attn_ref)


def _vmem_capacity_bytes():
    try:
        return int(pltpu.get_tpu_info().vmem_capacity_bytes)
    except Exception:
        return 64 * 1024 * 1024  # v7x has the smallest per-TensorCore VMEM


def _block_vmem_bytes(bb, tq, Lk, D, Dv, in_isz, mask_elems):
    """Rough per-grid-step VMEM footprint (double-buffered blocks + temps)."""
    q_blk = bb * tq * D * in_isz
    o_blk = bb * tq * Dv * in_isz
    attn_blk = bb * tq * Lk * in_isz            # attn out block (input dtype)
    kv_blk = bb * Lk * (D + Dv) * in_isz        # k + v (resident across q tiles)
    m_blk = mask_elems * in_isz                 # broadcast-shaped mask block
    pipelined = 2 * (q_blk + o_blk + attn_blk + kv_blk + m_blk)
    # In-kernel temporaries: f32 scores + f32 exp + in-dtype probs + scaled q
    # and f32 PV accumulator.
    scratch = 2 * bb * tq * Lk * 4 + bb * tq * Lk * in_isz \
        + bb * tq * (D + Dv) * 4
    return pipelined + scratch


def _pick_tiles(B, Lq, Lk, D, Dv, in_isz, mask_shape, budget):
    """Pick (batch-block bb, q-tile tq) so the working set fits `budget`."""
    def mask_elems(bb, tq):
        if mask_shape is None:
            return 0
        mb = bb if mask_shape[0] != 1 else 1
        mq = tq if mask_shape[1] != 1 else 1
        mk = Lk if mask_shape[2] != 1 else 1
        return mb * mq * mk

    def fits(bb, tq):
        return _block_vmem_bytes(bb, tq, Lk, D, Dv, in_isz,
                                 mask_elems(bb, tq)) <= budget

    if Lq <= 256:
        tq = Lq                      # whole (small) sequence per grid step
    else:
        # Prefer large, MXU/HBM-friendly q tiles (512/256/128).  Sub-128 sizes
        # are only a compile-safety fallback for pathological working sets.
        # TODO(synk): tile Lk (two-pass softmax) instead of shrinking tq.
        cands = [c for c in (512, 256, 128, 64, 32, 16, 8) if c <= Lq]
        tq = cands[-1]
        for c in cands:              # largest candidate that fits
            if fits(1, c):
                tq = c
                break

    bb = 1
    if tq == Lq and B > 1:
        # Tiny sequences: pack batch elements per step to amortize the
        # ~0.35 us per-grid-step overhead.
        for c in range(min(B, 8), 1, -1):
            if B % c == 0 and fits(c, tq):
                bb = c
                break
    return bb, tq


def _make_mask_index_map(batch_varies, q_varies):
    def index_map(b, i):
        return (b if batch_varies else 0, i if q_varies else 0, 0)
    return index_map


def scaled_dot_product_attention(q, k, v, temperature, mask=None):
    """Pallas TPU ScaledDotProductAttention forward.

    q: (B, Lq, D), k: (B, Lk, D), v: (B, Lk, Dv); optional mask broadcastable
    to (B, Lq, Lk).  Returns (output (B, Lq, Dv), attn (B, Lq, Lk)).
    """
    B, Lq, D = q.shape
    Bk, Lk, Dk = k.shape
    Bv, Lkv, Dv = v.shape
    assert D == Dk and B == Bk == Bv and Lk == Lkv

    inv_temp = 1.0 / float(temperature)
    in_isz = jnp.dtype(q.dtype).itemsize

    mask3 = None
    if mask is not None:
        mask_arr = jnp.asarray(mask)
        if mask_arr.ndim < 3:
            mask_arr = mask_arr.reshape((1,) * (3 - mask_arr.ndim)
                                        + mask_arr.shape)
        mb, mq, mk = mask_arr.shape
        assert mb in (1, B) and mq in (1, Lq) and mk in (1, Lk)
        # Keep the mask in its original (possibly broadcast) shape — no full
        # (B, Lq, Lk) bias slab in HBM.  0/1 in the input dtype so the kernel
        # DMA is cheap and the compare lowers cleanly.
        mask3 = (mask_arr != 0).astype(q.dtype)

    cap = _vmem_capacity_bytes()
    vmem_limit = int(cap * 3 // 4)
    budget = int(vmem_limit * 4 // 5)     # headroom for Mosaic-internal scratch
    mask_shape = None if mask3 is None else mask3.shape
    bb, tq = _pick_tiles(B, Lq, Lk, D, Dv, in_isz, mask_shape, budget)
    grid = (B // bb, pl.cdiv(Lq, tq))     # batch outer, q-tile inner

    q_spec = pl.BlockSpec((bb, tq, D), lambda b, i: (b, i, 0))
    k_spec = pl.BlockSpec((bb, Lk, D), lambda b, i: (b, 0, 0))    # resident over i
    v_spec = pl.BlockSpec((bb, Lk, Dv), lambda b, i: (b, 0, 0))   # resident over i
    out_spec = pl.BlockSpec((bb, tq, Dv), lambda b, i: (b, i, 0))
    attn_spec = pl.BlockSpec((bb, tq, Lk), lambda b, i: (b, i, 0))

    out_shape = (
        jax.ShapeDtypeStruct((B, Lq, Dv), q.dtype),
        jax.ShapeDtypeStruct((B, Lq, Lk), q.dtype),   # attn in input dtype
    )
    # Megacore: with >=2 batch steps, shard on batch so each core keeps its
    # own resident k/v block; otherwise let the cores split the q tiles.
    if grid[0] >= 2:
        dims = ("parallel", "arbitrary")
    else:
        dims = ("parallel", "parallel")
    compiler_params = pltpu.CompilerParams(
        dimension_semantics=dims,
        vmem_limit_bytes=vmem_limit,
    )

    if mask3 is None:
        kernel = functools.partial(_sdpa_kernel, inv_temp=inv_temp)
        in_specs = [q_spec, k_spec, v_spec]
        args = (q, k, v)
    else:
        mb, mq, mk = mask3.shape
        mask_block = (bb if mb != 1 else 1, tq if mq != 1 else 1, mk)
        mask_spec = pl.BlockSpec(mask_block,
                                 _make_mask_index_map(mb != 1, mq != 1))
        kernel = functools.partial(_sdpa_masked_kernel, inv_temp=inv_temp)
        in_specs = [q_spec, k_spec, v_spec, mask_spec]
        args = (q, k, v, mask3)

    return pl.pallas_call(
        kernel,
        out_shape=out_shape,
        grid=grid,
        in_specs=in_specs,
        out_specs=(out_spec, attn_spec),
        compiler_params=compiler_params,
    )(*args)


def _reference(q, k, v, temperature, mask=None):
    qf, kf, vf = (x.astype(jnp.float32) for x in (q, k, v))
    attn = jnp.einsum("bqd,bkd->bqk", qf / temperature, kf,
                      precision=jax.lax.Precision.HIGHEST)
    if mask is not None:
        attn = jnp.where(mask == 0, _NEG_INF, attn)
    attn = jax.nn.softmax(attn, axis=-1)
    out = jnp.einsum("bqk,bkd->bqd", attn, vf,
                     precision=jax.lax.Precision.HIGHEST)
    return out, attn


if __name__ == "__main__":
    key = jax.random.PRNGKey(0)
    kq, kk, kv, km, kb = jax.random.split(key, 5)

    B, Lq, Lk, D, Dv = 2, 8, 8, 32, 32
    temperature = float(D) ** 0.5

    q = jax.random.normal(kq, (B, Lq, D), dtype=jnp.float32)
    k = jax.random.normal(kk, (B, Lk, D), dtype=jnp.float32)
    v = jax.random.normal(kv, (B, Lk, Dv), dtype=jnp.float32)

    mask_full = (jax.random.uniform(km, (B, Lq, Lk)) > 0.3).astype(jnp.int32)
    mask_full = mask_full.at[:, :, 0].set(1)   # every query keeps >=1 valid key
    mask_bcast = (jax.random.uniform(kb, (B, 1, Lk)) > 0.3).astype(jnp.int32)
    mask_bcast = mask_bcast.at[:, :, 0].set(1)

    # f32, unmasked
    out, attn = scaled_dot_product_attention(q, k, v, temperature)
    jax.block_until_ready((out, attn))
    ref_out, ref_attn = _reference(q, k, v, temperature)
    assert jnp.allclose(out, ref_out, atol=3e-3, rtol=3e-3)
    assert jnp.allclose(attn, ref_attn, atol=3e-3, rtol=3e-3)

    # f32, full-shape mask
    out_m, attn_m = scaled_dot_product_attention(q, k, v, temperature,
                                                 mask=mask_full)
    jax.block_until_ready((out_m, attn_m))
    ref_out_m, ref_attn_m = _reference(q, k, v, temperature, mask=mask_full)
    assert jnp.allclose(out_m, ref_out_m, atol=3e-3, rtol=3e-3)
    assert jnp.allclose(attn_m, ref_attn_m, atol=3e-3, rtol=3e-3)

    # f32, broadcast (B, 1, Lk) mask — exercises the size-1 mask block dims
    out_bm, attn_bm = scaled_dot_product_attention(q, k, v, temperature,
                                                   mask=mask_bcast)
    jax.block_until_ready((out_bm, attn_bm))
    ref_out_bm, ref_attn_bm = _reference(q, k, v, temperature, mask=mask_bcast)
    assert jnp.allclose(out_bm, ref_out_bm, atol=3e-3, rtol=3e-3)
    assert jnp.allclose(attn_bm, ref_attn_bm, atol=3e-3, rtol=3e-3)

    # bf16, masked — exercises the bf16-native MXU path
    qb, kb_, vb = (x.astype(jnp.bfloat16) for x in (q, k, v))
    out_b, attn_b = scaled_dot_product_attention(qb, kb_, vb, temperature,
                                                 mask=mask_full)
    jax.block_until_ready((out_b, attn_b))
    ref_out_b, ref_attn_b = _reference(qb, kb_, vb, temperature, mask=mask_full)
    assert jnp.allclose(out_b.astype(jnp.float32), ref_out_b,
                        atol=4e-2, rtol=4e-2)
    assert jnp.allclose(attn_b.astype(jnp.float32), ref_attn_b,
                        atol=4e-2, rtol=4e-2)

    print("KERNEL_OK")
</pallas_src>

<mosaic_0001>
module attributes {stable_mosaic.version = 11 : i64} {
  func.func @_sdpa_kernel(%arg0: i32, %arg1: i32, %arg2: memref<2x8x32xf32, #tpu.memory_space<vmem>>, %arg3: memref<2x8x32xf32, #tpu.memory_space<vmem>>, %arg4: memref<2x8x32xf32, #tpu.memory_space<vmem>>, %arg5: memref<2x8x32xf32, #tpu.memory_space<vmem>>, %arg6: memref<2x8x8xf32, #tpu.memory_space<vmem>>) attributes {dimension_semantics = [#tpu.dimension_semantics<parallel>, #tpu.dimension_semantics<parallel>], iteration_bounds = array<i64: 1, 1>, scalar_prefetch = 0 : i64, scratch_operands = 0 : i64, tpu.core_type = #tpu.core_type<tc>, window_params = [{transform_indices = @transform_0, window_bounds = array<i64: 2, 8, 32>}, {transform_indices = @transform_1, window_bounds = array<i64: 2, 8, 32>}, {transform_indices = @transform_2, window_bounds = array<i64: 2, 8, 32>}, {transform_indices = @transform_3, window_bounds = array<i64: 2, 8, 32>}, {transform_indices = @transform_4, window_bounds = array<i64: 2, 8, 8>}]} {
    %c0 = arith.constant 0 : index
    %c0_0 = arith.constant 0 : index
    %c0_1 = arith.constant 0 : index
    %0 = vector.load %arg2[%c0, %c0_0, %c0_1] : memref<2x8x32xf32, #tpu.memory_space<vmem>>, vector<2x8x32xf32>
    %cst = arith.constant 0.176776692 : f32
    %1 = vector.broadcast %cst : f32 to vector<2x8x32xf32>
    %2 = arith.mulf %0, %1 : vector<2x8x32xf32>
    %c0_2 = arith.constant 0 : index
    %c0_3 = arith.constant 0 : index
    %c0_4 = arith.constant 0 : index
    %3 = vector.load %arg3[%c0_2, %c0_3, %c0_4] : memref<2x8x32xf32, #tpu.memory_space<vmem>>, vector<2x8x32xf32>
    "tpu.trace_start"() <{level = 10 : i32, message = "bqd,bkd->bqk"}> : () -> ()
    %cst_5 = arith.constant dense<0.000000e+00> : vector<2x8x8xf32>
    %4 = tpu.matmul %2, %3, %cst_5 {dimension_numbers = #tpu.dot_dimension_numbers<[2], [2], [1], [1], [0, 0, 0, 1, 1, 1], [0], [0]>} : vector<2x8x32xf32>, vector<2x8x32xf32>, vector<2x8x8xf32> -> vector<2x8x8xf32>
    "tpu.trace_stop"() : () -> ()
    %cst_6 = arith.constant dense<0xFF800000> : vector<2x8xf32>
    %5 = vector.multi_reduction <maximumf>, %4, %cst_6 [2] : vector<2x8x8xf32> to vector<2x8xf32>
    %6 = vector.shape_cast %5 : vector<2x8xf32> to vector<2x8x1xf32>
    %7 = vector.broadcast %6 : vector<2x8x1xf32> to vector<2x8x8xf32>
    %8 = arith.subf %4, %7 : vector<2x8x8xf32>
    %9 = math.exp %8 : vector<2x8x8xf32>
    %cst_7 = arith.constant dense<0.000000e+00> : vector<2x8xf32>
    %10 = vector.multi_reduction <add>, %9, %cst_7 [2] : vector<2x8x8xf32> to vector<2x8xf32>
    %11 = vector.shape_cast %10 : vector<2x8xf32> to vector<2x8x1xf32>
    %12 = tpu.reciprocal %11 {approx = true} : vector<2x8x1xf32> -> vector<2x8x1xf32>
    %13 = arith.mulf %11, %12 : vector<2x8x1xf32>
    %cst_8 = arith.constant 2.000000e+00 : f32
    %14 = vector.broadcast %cst_8 : f32 to vector<2x8x1xf32>
    %15 = arith.subf %14, %13 : vector<2x8x1xf32>
    %16 = arith.mulf %12, %15 : vector<2x8x1xf32>
    %17 = vector.broadcast %16 : vector<2x8x1xf32> to vector<2x8x8xf32>
    %18 = arith.mulf %9, %17 : vector<2x8x8xf32>
    %c0_9 = arith.constant 0 : index
    %c0_10 = arith.constant 0 : index
    %c0_11 = arith.constant 0 : index
    %19 = vector.load %arg6[%c0_9, %c0_10, %c0_11] : memref<2x8x8xf32, #tpu.memory_space<vmem>>, vector<2x8x8xf32>
    tpu.vector_store %arg6[%c0_9, %c0_10, %c0_11], %18 {strides = array<i32>} : memref<2x8x8xf32, #tpu.memory_space<vmem>>, vector<2x8x8xf32>,
    %c0_12 = arith.constant 0 : index
    %c0_13 = arith.constant 0 : index
    %c0_14 = arith.constant 0 : index
    %20 = vector.load %arg4[%c0_12, %c0_13, %c0_14] : memref<2x8x32xf32, #tpu.memory_space<vmem>>, vector<2x8x32xf32>
    "tpu.trace_start"() <{level = 10 : i32, message = "bqk,bkd->bqd"}> : () -> ()
    %cst_15 = arith.constant dense<0.000000e+00> : vector<2x8x32xf32>
    %21 = tpu.matmul %9, %20, %cst_15 {dimension_numbers = #tpu.dot_dimension_numbers<[2], [1], [1], [2], [0, 0, 0, 1, 1, 2], [0], [0]>} : vector<2x8x8xf32>, vector<2x8x32xf32>, vector<2x8x32xf32> -> vector<2x8x32xf32>
    "tpu.trace_stop"() : () -> ()
    %22 = vector.broadcast %16 : vector<2x8x1xf32> to vector<2x8x32xf32>
    %23 = arith.mulf %21, %22 : vector<2x8x32xf32>
    %c0_16 = arith.constant 0 : index
    %c0_17 = arith.constant 0 : index
    %c0_18 = arith.constant 0 : index
    %24 = vector.load %arg5[%c0_16, %c0_17, %c0_18] : memref<2x8x32xf32, #tpu.memory_space<vmem>>, vector<2x8x32xf32>
    tpu.vector_store %arg5[%c0_16, %c0_17, %c0_18], %23 {strides = array<i32>} : memref<2x8x32xf32, #tpu.memory_space<vmem>>, vector<2x8x32xf32>,
    return
  }
  func.func @transform_0(%arg0: i32, %arg1: i32) -> (i32, i32, i32) {
    %c0_i32 = arith.constant 0 : i32
    %c0_i32_0 = arith.constant 0 : i32
    return %arg0, %arg1, %c0_i32 : i32, i32, i32
  }
  func.func @transform_1(%arg0: i32, %arg1: i32) -> (i32, i32, i32) {
    %c0_i32 = arith.constant 0 : i32
    %c0_i32_0 = arith.constant 0 : i32
    %c0_i32_1 = arith.constant 0 : i32
    return %arg0, %c0_i32, %c0_i32_0 : i32, i32, i32
  }
  func.func @transform_2(%arg0: i32, %arg1: i32) -> (i32, i32, i32) {
    %c0_i32 = arith.constant 0 : i32
    %c0_i32_0 = arith.constant 0 : i32
    %c0_i32_1 = arith.constant 0 : i32
    return %arg0, %c0_i32, %c0_i32_0 : i32, i32, i32
  }
  func.func @transform_3(%arg0: i32, %arg1: i32) -> (i32, i32, i32) {
    %c0_i32 = arith.constant 0 : i32
    %c0_i32_0 = arith.constant 0 : i32
    return %arg0, %arg1, %c0_i32 : i32, i32, i32
  }
  func.func @transform_4(%arg0: i32, %arg1: i32) -> (i32, i32, i32) {
    %c0_i32 = arith.constant 0 : i32
    %c0_i32_0 = arith.constant 0 : i32
    return %arg0, %arg1, %c0_i32 : i32, i32, i32
  }
}

</mosaic_0001>

<llo_original>
// kernel: tpu_custom_call.1
$region0: #{tpu_custom_call.1}
  #allocation0 [shape = 'u32[]', space=smem, size = 0x4, offset = 0x4, fixed_abs, tag = 'smem constant byte address 0x4 - core index']
  #allocation1 [shape = 'u32[72,128]{1,0:T(1,128)}', space=vmem, size = 0x9000, scoped, tag = 'internal scratch']
  %s0 = inlined_call_operand.hbm [shape: f32[2,8,32], index: 0, kind: input, shape index: {}]
  %s1 = inlined_call_operand.hbm [shape: f32[2,8,32], index: 1, kind: input, shape index: {}]
  %s2 = inlined_call_operand.hbm [shape: f32[2,8,32], index: 2, kind: input, shape index: {}]
  %s3 = inlined_call_operand.hbm [shape: f32[2,8,32], index: 3, kind: output, shape index: {0}]
  %s4 = inlined_call_operand.hbm [shape: f32[2,8,8], index: 4, kind: output, shape index: {1}]
  %5 = xla_tuple %s3, %s4
  %s6 = sld [smem:[#allocation0]]
  $region42: #{tpu_custom_call.1} parent=0
    _
  %s8 = ssub.s32 1, %s6
  %s9 = scalar_select 0, %s8, %s6
  $region1: #{tpu_custom_call.1} parent=0
    #allocation2 [shape = 'u8[8192]{0}', space=vmem, size = 0x2000, scoped, tag = 'input window, operand 0, single buffered']
    #allocation3 [shape = 's32[1]{0}', space=sflag, size = 0x4, scoped, tag = 'scoped memory for tpu_custom_call.1']
    #allocation4 [shape = 's32[1]{0}', space=sflag, size = 0x4, scoped, tag = 'scoped memory for tpu_custom_call.1']
    #allocation5 [shape = 'u8[8192]{0}', space=vmem, size = 0x2000, scoped, tag = 'input window, operand 1, single buffered']
    #allocation6 [shape = 's32[1]{0}', space=sflag, size = 0x4, scoped, tag = 'scoped memory for tpu_custom_call.1']
    #allocation7 [shape = 'u8[8192]{0}', space=vmem, size = 0x2000, scoped, tag = 'input window, operand 2, single buffered']
    #allocation8 [shape = 'u8[8192]{0}', space=vmem, size = 0x2000, scoped, tag = 'output window, operand 0, single buffered']
    #allocation9 [shape = 'u8[8192]{0}', space=vmem, size = 0x2000, scoped, tag = 'output window, operand 1, single buffered']
    #allocation10 [shape = 's32[1]{0}', space=sflag, size = 0x4, scoped, tag = 'scoped memory for tpu_custom_call.1']
    %10 = vsyncpa [#allocation3], 0
    %11 = vsyncpa [#allocation6], 0
    %12 = vsyncpa [#allocation4], 0
    %13 = vsyncpa [#allocation10], 0
    // Predicated region
    $region2: #{tpu_custom_call.1} parent=1 // pred_check
      _
    $region3: #{tpu_custom_call.1} parent=1 // pred_check_branch
      %15 = sbr.rel (0) target = $region5
    $region4: #{tpu_custom_call.1} parent=1 // pred_region
      %17 = vsyncadd [#allocation3], 0
      %s18 = sshll.u32 %s0, 4
      %s19 = int_to_ptr.hbm [resolvable:$true] %s18
      %s20 = sshll.u32 [#allocation2], 4
      %s21 = int_to_ptr.vmem [resolvable:$true] %s20
      %26 = dma.hbm_to_vmem [thread:$0]  %s19, 256, %s21, [#allocation3], 128, 128, 8
    $region5: #{tpu_custom_call.1} parent=1 // pred_fallthru
      _
    // Predicated region
    $region6: #{tpu_custom_call.1} parent=1 // pred_check
      _
    $region7: #{tpu_custom_call.1} parent=1 // pred_check_branch
      %28 = sbr.rel (0) target = $region9
    $region8: #{tpu_custom_call.1} parent=1 // pred_region
      %30 = vsyncadd [#allocation6], 0
      %s31 = sshll.u32 %s1, 4
      %s32 = int_to_ptr.hbm [resolvable:$true] %s31
      %s33 = sshll.u32 [#allocation5], 4
      %s34 = int_to_ptr.vmem [resolvable:$true] %s33
      %39 = dma.hbm_to_vmem [thread:$0]  %s32, 256, %s34, [#allocation6], 128, 128, 8
    $region9: #{tpu_custom_call.1} parent=1 // pred_fallthru
      _
    // Predicated region
    $region10: #{tpu_custom_call.1} parent=1 // pred_check
      _
    $region11: #{tpu_custom_call.1} parent=1 // pred_check_branch
      %41 = sbr.rel (0) target = $region13
    $region12: #{tpu_custom_call.1} parent=1 // pred_region
      %43 = vsyncadd [#allocation6], 0
      %s44 = sshll.u32 %s2, 4
      %s45 = int_to_ptr.hbm [resolvable:$true] %s44
      %s46 = sshll.u32 [#allocation7], 4
      %s47 = int_to_ptr.vmem [resolvable:$true] %s46
      %52 = dma.hbm_to_vmem [thread:$0]  %s45, 256, %s47, [#allocation6], 128, 128, 8
    $region13: #{tpu_custom_call.1} parent=1 // pred_fallthru
      _
    // Predicated region
    $region14: #{tpu_custom_call.1} parent=1 // pred_check
      _
    $region15: #{tpu_custom_call.1} parent=1 // pred_check_branch
      %54 = sbr.rel (0) target = $region17
    $region16: #{tpu_custom_call.1} parent=1 // pred_region
      %56 = dma.done [#allocation3], 256
    $region17: #{tpu_custom_call.1} parent=1 // pred_fallthru
      _
    // Predicated region
    $region18: #{tpu_custom_call.1} parent=1 // pred_check
      _
    $region19: #{tpu_custom_call.1} parent=1 // pred_check_branch
      %58 = sbr.rel (0) target = $region21
    $region20: #{tpu_custom_call.1} parent=1 // pred_region
      %60 = dma.done [#allocation6], 256
    $region21: #{tpu_custom_call.1} parent=1 // pred_fallthru
      _
    // Predicated region
    $region22: #{tpu_custom_call.1} parent=1 // pred_check
      _
    $region23: #{tpu_custom_call.1} parent=1 // pred_check_branch
      %62 = sbr.rel (0) target = $region25
    $region24: #{tpu_custom_call.1} parent=1 // pred_region
      %64 = dma.done [#allocation6], 256
    $region25: #{tpu_custom_call.1} parent=1 // pred_fallthru
      _
    %v65 = vld [vmem:[#allocation2] sm:$0xff]
    %v66 = vld [vmem:[#allocation2 + $0x8] sm:$0xff]
    %v67 = vmul.f32 %v65, 0.17677669
    %v68 = vmul.f32 %v66, 0.17677669
    %v69 = vld [vmem:[#allocation5] sm:$0xff]
    %v70 = vld [vmem:[#allocation5 + $0x8] sm:$0xff]
    %vm71 = vcmask 261120
    %v73 = vsel %vm71, %v67, 0
    %v76 = vsel %vm71, %v69, 0
    %78 = vmatpush.xpose.msra.mxu0 0.0
    %79 = vmatpush.xpose.msra.mxu0 0.0
    %80 = vmatpush.xpose.msra.mxu0 0.0
    %81 = vmatpush.xpose.msra.mxu0 0.0
    %82 = vmatpush.xpose.msra.mxu0 0.0
    %83 = vmatpush.xpose.msra.mxu0 0.0
    %84 = vmatpush.xpose.msra.mxu0 0.0
    %85 = vmatpush.xpose.msra.mxu0 0.0
    %86 = vmatpush.xpose.msra.mxu0 0.0
    %87 = vmatpush.xpose.msra.mxu0 0.0
    %88 = vmatpush.xpose.msra.mxu0 0.0
    %89 = vmatpush.xpose.msra.mxu0 0.0
    %90 = vmatpush.xpose.msra.mxu0 0.0
    %91 = vmatpush.xpose.msra.mxu0 0.0
    %92 = vmatpush.xpose.msra.mxu0 0.0
    %93 = vmatpush.xpose.msra.mxu0 %v76
    %94 = vmatmul.f32.gmra.mxu0 %v73
    %v95 = vpop.f32.mrf.mxu0
    %v96 = vadd.f32 0.0, %v95
    %97 = vdwg.mxu0
    %v99 = vsel %vm71, %v68, 0
    %v102 = vsel %vm71, %v70, 0
    %104 = vmatpush.xpose.msra.mxu0 0.0
    %105 = vmatpush.xpose.msra.mxu0 0.0
    %106 = vmatpush.xpose.msra.mxu0 0.0
    %107 = vmatpush.xpose.msra.mxu0 0.0
    %108 = vmatpush.xpose.msra.mxu0 0.0
    %109 = vmatpush.xpose.msra.mxu0 0.0
    %110 = vmatpush.xpose.msra.mxu0 0.0
    %111 = vmatpush.xpose.msra.mxu0 0.0
    %112 = vmatpush.xpose.msra.mxu0 0.0
    %113 = vmatpush.xpose.msra.mxu0 0.0
    %114 = vmatpush.xpose.msra.mxu0 0.0
    %115 = vmatpush.xpose.msra.mxu0 0.0
    %116 = vmatpush.xpose.msra.mxu0 0.0
    %117 = vmatpush.xpose.msra.mxu0 0.0
    %118 = vmatpush.xpose.msra.mxu0 0.0
    %119 = vmatpush.xpose.msra.mxu0 %v102
    %120 = vmatmul.f32.gmra.mxu0 %v99
    %v121 = vpop.f32.mrf.mxu0
    %v122 = vadd.f32 0.0, %v121
    %123 = vdwg.mxu0
    %vm124 = vcmask 64512
    %v125 = vsel %vm124, %v96, -inf
    %126 = vmax.xlane.f32.xlu0 %v125
    %v127 = vpop.xlane.xlu0 %126
    %v128 = vsel %vm124, %v122, -inf
    %129 = vmax.xlane.f32.xlu0 %v128
    %v130 = vpop.xlane.xlu0 %129
    %v131 = vsub.f32 %v96, %v127
    %v132 = vsub.f32 %v122, %v130
    %v133 = vmul.f32 %v131, 1.442695
    %v134 = vpow.pop %v133
    %v135 = vmul.f32 %v132, 1.442695
    %v136 = vpow.pop %v135
    %v137 = vsel %vm124, %v134, 0.0
    %138 = vadd.xlane.f32.xlu0 %v137
    %v139 = vpop.xlane.xlu0 %138
    %v140 = vsel %vm124, %v136, 0.0
    %141 = vadd.xlane.f32.xlu0 %v140
    %v142 = vpop.xlane.xlu0 %141
    %v143 = vrcp.pop %v139
    %v144 = vrcp.pop %v142
    %v145 = vmul.f32 %v139, %v143
    %v146 = vmul.f32 %v142, %v144
    %v147 = vsub.f32 2.0, %v145
    %v148 = vsub.f32 2.0, %v146
    %v149 = vmul.f32 %v143, %v147
    %v150 = vmul.f32 %v144, %v148
    %v151 = vmul.f32 %v134, %v149
    %v152 = vmul.f32 %v136, %v150
    %153 = vst.msk [vmem:[#allocation9] sm:$0xff] %vm124, %v151
    %154 = vst.msk [vmem:[#allocation9 + $0x8] sm:$0xff] %vm124, %v152
    %v155 = vld [vmem:[#allocation7] sm:$0xff]
    %v156 = vld [vmem:[#allocation7 + $0x8] sm:$0xff]
    %v158 = vsel %vm124, %v134, 0
    %160 = vmatpush.msra.mxu0 0.0
    %161 = vmatpush.msra.mxu0 0.0
    %162 = vmatpush.msra.mxu0 0.0
    %163 = vmatpush.msra.mxu0 0.0
    %164 = vmatpush.msra.mxu0 0.0
    %165 = vmatpush.msra.mxu0 0.0
    %166 = vmatpush.msra.mxu0 0.0
    %167 = vmatpush.msra.mxu0 0.0
    %168 = vmatpush.msra.mxu0 0.0
    %169 = vmatpush.msra.mxu0 0.0
    %170 = vmatpush.msra.mxu0 0.0
    %171 = vmatpush.msra.mxu0 0.0
    %172 = vmatpush.msra.mxu0 0.0
    %173 = vmatpush.msra.mxu0 0.0
    %174 = vmatpush.msra.mxu0 0.0
    %175 = vmatpush.msra.mxu0 %v155
    %176 = vmatmul.f32.gmra.mxu0 %v158
    %v177 = vpop.f32.mrf.mxu0
    %v178 = vadd.f32 0.0, %v177
    %179 = vdwg.mxu0
    %v181 = vsel %vm124, %v136, 0
    %183 = vmatpush.msra.mxu0 0.0
    %184 = vmatpush.msra.mxu0 0.0
    %185 = vmatpush.msra.mxu0 0.0
    %186 = vmatpush.msra.mxu0 0.0
    %187 = vmatpush.msra.mxu0 0.0
    %188 = vmatpush.msra.mxu0 0.0
    %189 = vmatpush.msra.mxu0 0.0
    %190 = vmatpush.msra.mxu0 0.0
    %191 = vmatpush.msra.mxu0 0.0
    %192 = vmatpush.msra.mxu0 0.0
    %193 = vmatpush.msra.mxu0 0.0
    %194 = vmatpush.msra.mxu0 0.0
    %195 = vmatpush.msra.mxu0 0.0
    %196 = vmatpush.msra.mxu0 0.0
    %197 = vmatpush.msra.mxu0 0.0
    %198 = vmatpush.msra.mxu0 %v156
    %199 = vmatmul.f32.gmra.mxu0 %v181
    %v200 = vpop.f32.mrf.mxu0
    %v201 = vadd.f32 0.0, %v200
    %202 = vdwg.mxu0
    %v203 = vmul.f32 %v178, %v149
    %v204 = vmul.f32 %v201, %v150
    %205 = vst.msk [vmem:[#allocation8] sm:$0xff] %vm71, %v203
    %206 = vst.msk [vmem:[#allocation8 + $0x8] sm:$0xff] %vm71, %v204
    // Predicated region
    $region26: #{tpu_custom_call.1} parent=1 // pred_check
      _
    $region27: #{tpu_custom_call.1} parent=1 // pred_check_branch
      %208 = sbr.rel (0) target = $region29
    $region28: #{tpu_custom_call.1} parent=1 // pred_region
      %210 = vsyncadd [#allocation4], 0
      %s211 = sshll.u32 [#allocation8], 4
      %s212 = int_to_ptr.vmem [resolvable:$true] %s211
      %s213 = sshll.u32 %s3, 4
      %s214 = int_to_ptr.hbm [resolvable:$true] %s213
      %219 = dma.vmem_to_hbm [thread:$0]  %s212, 256, %s214, [#allocation4], 128, 128, 8
    $region29: #{tpu_custom_call.1} parent=1 // pred_fallthru
      _
    // Predicated region
    $region30: #{tpu_custom_call.1} parent=1 // pred_check
      _
    $region31: #{tpu_custom_call.1} parent=1 // pred_check_branch
      %221 = sbr.rel (0) target = $region33
    $region32: #{tpu_custom_call.1} parent=1 // pred_region
      %223 = vsyncadd [#allocation10], 0
      %s224 = sshll.u32 [#allocation9], 4
      %s225 = int_to_ptr.vmem [resolvable:$true] %s224
      %s226 = sshll.u32 %s4, 4
      %s227 = int_to_ptr.hbm [resolvable:$true] %s226
      %232 = dma.vmem_to_hbm [thread:$0]  %s225, 256, %s227, [#allocation10], 128, 128, 8
    $region33: #{tpu_custom_call.1} parent=1 // pred_fallthru
      _
    // Predicated region
    $region34: #{tpu_custom_call.1} parent=1 // pred_check
      _
    $region35: #{tpu_custom_call.1} parent=1 // pred_check_branch
      %234 = sbr.rel (0) target = $region37
    $region36: #{tpu_custom_call.1} parent=1 // pred_region
      %236 = dma.done [#allocation4], 256
    $region37: #{tpu_custom_call.1} parent=1 // pred_fallthru
      _
    // Predicated region
    $region38: #{tpu_custom_call.1} parent=1 // pred_check
      _
    $region39: #{tpu_custom_call.1} parent=1 // pred_check_branch
      %238 = sbr.rel (0) target = $region41
    $region40: #{tpu_custom_call.1} parent=1 // pred_region
      %240 = dma.done [#allocation10], 256
    $region41: #{tpu_custom_call.1} parent=1 // pred_fallthru
      _
    %241 = vsyncpa [#allocation3], 1
    %242 = vsyncpa [#allocation6], 1
    %243 = vsyncpa [#allocation4], 1
    %244 = vsyncpa [#allocation10], 1

</llo_original>
